<compile_context>
chip_gen: v7x
topology: tpu7x:2x2x1
jax: 0.10.0
libtpu: 0.0.40
codegen_flags: <defaults>
</compile_context>

<pallas_src>
import functools
import math

import jax
import jax.numpy as jnp
from jax.experimental import pallas as pl
from jax.experimental.pallas import tpu as pltpu

_MAX_TILE = 512  # cap for row / reduction / column tiles


def _round_up(a: int, b: int) -> int:
    return (a + b - 1) // b * b


def _row_tile(m: int) -> int:
    """Row tile: multiple of 8 (or full dim); >=2 tiles when m>=16 (v7x)."""
    if m >= _MAX_TILE:
        return _MAX_TILE
    if m >= 16:
        # Split into (at least) two row tiles so both v7x TensorCores get work.
        return _round_up((m + 1) // 2, 8)
    return m  # single tile equal to the full (small) dim


def _red_tile(k: int) -> int:
    """Reduction tile: multiple of 128 (or the full dim when k < 128)."""
    if k < 128:
        return k
    return min(_MAX_TILE, (k // 128) * 128)


def _col_tile(n_pad: int) -> int:
    """Output-column tile: multiple of 128 that divides n_pad."""
    if n_pad <= _MAX_TILE:
        return n_pad
    for t in (512, 384, 256, 128):
        if n_pad % t == 0:
            return t
    return 128


def _matmul_kernel(a_ref, b_ref, bias_ref, o_ref, acc_ref, *,
                   k_valid, tk, compute_dtype):
    """One (row i, col j, reduction k) grid step of  out = a @ b + bias.

    a_ref:    (TM, TK)   raw input dtype (cast to compute_dtype in-kernel)
    b_ref:    (TK, TN)   compute_dtype, padded rows/cols are exact zeros
    bias_ref: (1, TN)    f32
    o_ref:    (TM, TN)   f32
    acc_ref:  (TM, TN)   f32 scratch accumulator
    """
    k = pl.program_id(2)

    @pl.when(k == 0)
    def _init():
        acc_ref[...] = jnp.zeros_like(acc_ref)

    a = a_ref[...]
    if k_valid % tk != 0:
        # Ragged last reduction tile: the columns of `a` beyond k_valid are
        # uninitialized VMEM (possibly NaN). Zero them so they cannot poison
        # the accumulation (b's padded rows are already exact zeros).
        col = k * tk + jax.lax.broadcasted_iota(jnp.int32, (1, tk), 1)
        a = jnp.where(col < k_valid, a, 0)

    acc_ref[...] += jnp.dot(a.astype(compute_dtype), b_ref[...],
                            preferred_element_type=jnp.float32)

    @pl.when(k == pl.num_programs(2) - 1)
    def _finalize():
        o_ref[...] = (acc_ref[...] + bias_ref[...]).astype(o_ref.dtype)


def _pallas_matmul(a, b, bias, *, compute_dtype):
    """out = a @ b (+ bias). a: (M, K) streamed raw; b: (K, Nc) padded/cast.

    Returns float32 (M, Nc).
    """
    m, k_dim = a.shape
    k2, nc = b.shape
    assert k_dim == k2, (a.shape, b.shape)

    tm = _row_tile(m)
    tk = _red_tile(k_dim)
    n_pad = _round_up(nc, 128)
    tn = _col_tile(n_pad)
    k_pad = _round_up(k_dim, tk)

    # b / bias are the small operands: pad + cast in the wrapper is cheap
    # relative to streaming `a`. Padded rows / cols are exact zeros.
    b_p = jnp.pad(b.astype(compute_dtype), ((0, k_pad - k_dim), (0, n_pad - nc)))
    if bias is None:
        bias_p = jnp.zeros((1, n_pad), jnp.float32)
    else:
        bias_p = jnp.pad(bias.astype(jnp.float32).reshape(1, nc),
                         ((0, 0), (0, n_pad - nc)))

    grid = (pl.cdiv(m, tm), n_pad // tn, k_pad // tk)

    kernel = functools.partial(_matmul_kernel, k_valid=k_dim, tk=tk,
                               compute_dtype=compute_dtype)

    cost = pl.CostEstimate(
        flops=int(2 * m * k_pad * n_pad),
        transcendentals=0,
        bytes_accessed=int(a.size * a.dtype.itemsize * grid[1]
                           + b_p.size * b_p.dtype.itemsize * grid[0]
                           + bias_p.size * 4
                           + m * n_pad * 4),
    )

    out = pl.pallas_call(
        kernel,
        out_shape=jax.ShapeDtypeStruct((m, n_pad), jnp.float32),
        grid_spec=pltpu.PrefetchScalarGridSpec(
            num_scalar_prefetch=0,
            grid=grid,
            in_specs=[
                pl.BlockSpec((tm, tk), lambda i, j, k: (i, k)),   # a (raw)
                pl.BlockSpec((tk, tn), lambda i, j, k: (k, j)),   # b
                pl.BlockSpec((1, tn), lambda i, j, k: (0, j)),    # bias
            ],
            out_specs=pl.BlockSpec((tm, tn), lambda i, j, k: (i, j)),
            scratch_shapes=[pltpu.VMEM((tm, tn), jnp.float32)],
        ),
        compiler_params=pltpu.CompilerParams(
            # Row / column tiles split across TensorCores (v7x megacore);
            # the reduction axis is sequential and last.
            dimension_semantics=("parallel", "parallel", "arbitrary"),
            # Live tiles (<= ~7 MiB double-buffered) fit comfortably on
            # v5e / v6e / v7x.
            vmem_limit_bytes=32 * 1024 * 1024,
        ),
        cost_estimate=cost,
    )(a, b_p, bias_p)

    return out[:, :nc]


def graph_convolution(adj, x, weight, bias=None, *, compute_dtype=jnp.bfloat16):
    """adj: (N, N), x: (N, in_f), weight: (in_f, out_f), bias: (out_f,) or None.

    Returns float32 (N, out_f). Matmul inputs are cast to `compute_dtype`
    (default bfloat16, f32 accumulation). Use compute_dtype=jnp.float32 for
    bit-faithful parity with the full-f32 PyTorch reference.
    """
    in_f, out_f = weight.shape
    in_pad = _round_up(in_f, 128)
    out_pad = _round_up(out_f, 128)

    if out_pad <= in_pad:
        # adj @ (x @ W): the big N^2 matmul contracts against out_pad columns.
        y = _pallas_matmul(x, weight, None, compute_dtype=compute_dtype)
        out = _pallas_matmul(adj, y, bias, compute_dtype=compute_dtype)
    else:
        # (adj @ x) @ W: the big N^2 matmul contracts against in_pad columns.
        z = _pallas_matmul(adj, x, None, compute_dtype=compute_dtype)
        out = _pallas_matmul(z, weight, bias, compute_dtype=compute_dtype)
    return out


if __name__ == "__main__":
    # TODO(synk): for graphs this tiny, batch many graphs into one call at the
    # call site; per-call overhead dominates any in-kernel work here.
    key = jax.random.PRNGKey(0)

    # ---- Config 1: the module's natural small shapes (association case A).
    N, IN_F, OUT_F = 16, 32, 32
    k_adj, k_x, k_w, k_b, key = jax.random.split(key, 5)
    std = 1.0 / math.sqrt(OUT_F)  # mirrors initialize_parameters()
    weight = jax.random.uniform(k_w, (IN_F, OUT_F), jnp.float32, -std, std)
    bias = jax.random.uniform(k_b, (OUT_F,), jnp.float32, -std, std)
    adj = jax.random.uniform(k_adj, (N, N), jnp.float32)
    x = jax.random.normal(k_x, (N, IN_F), jnp.float32)

    # bf16 fast path vs a reference using the same bf16-input/f32-accum math.
    out_bf16 = jax.block_until_ready(graph_convolution(adj, x, weight, bias))
    assert out_bf16.shape == (N, OUT_F)
    y_ref = jnp.dot(x.astype(jnp.bfloat16), weight.astype(jnp.bfloat16),
                    preferred_element_type=jnp.float32)
    ref_bf16 = jnp.dot(adj.astype(jnp.bfloat16), y_ref.astype(jnp.bfloat16),
                       preferred_element_type=jnp.float32) + bias[None, :]
    assert jnp.allclose(out_bf16, ref_bf16, atol=2e-3, rtol=2e-3), (
        float(jnp.max(jnp.abs(out_bf16 - ref_bf16))))

    # f32 path: parity with the PyTorch .float() semantics.
    out_f32 = jax.block_until_ready(
        graph_convolution(adj, x, weight, bias, compute_dtype=jnp.float32))
    ref_f32 = adj @ (x @ weight) + bias[None, :]
    assert jnp.allclose(out_f32, ref_f32, atol=1e-4, rtol=1e-4), (
        float(jnp.max(jnp.abs(out_f32 - ref_f32))))

    # ---- Config 2: exercises the ragged-reduction mask, multi row tiles and
    #      association case B ((adj @ x) @ W since out_pad > in_pad).
    N2, IN_F2, OUT_F2 = 200, 40, 168
    k_adj2, k_x2, k_w2, k_b2, key = jax.random.split(key, 5)
    std2 = 1.0 / math.sqrt(OUT_F2)
    weight2 = jax.random.uniform(k_w2, (IN_F2, OUT_F2), jnp.float32, -std2, std2)
    bias2 = jax.random.uniform(k_b2, (OUT_F2,), jnp.float32, -std2, std2)
    adj2 = jax.random.uniform(k_adj2, (N2, N2), jnp.float32)
    x2 = jax.random.normal(k_x2, (N2, IN_F2), jnp.float32)

    out2_f32 = jax.block_until_ready(
        graph_convolution(adj2, x2, weight2, bias2, compute_dtype=jnp.float32))
    ref2_f32 = adj2 @ (x2 @ weight2) + bias2[None, :]
    assert out2_f32.shape == (N2, OUT_F2)
    assert jnp.allclose(out2_f32, ref2_f32, atol=1e-3, rtol=1e-3), (
        float(jnp.max(jnp.abs(out2_f32 - ref2_f32))))

    # Default bf16 path on config 2: execution + finiteness coverage.
    out2_bf16 = jax.block_until_ready(
        graph_convolution(adj2, x2, weight2, bias2))
    assert out2_bf16.shape == (N2, OUT_F2)
    assert bool(jnp.all(jnp.isfinite(out2_bf16)))

    print("KERNEL_OK")
</pallas_src>

<mosaic_0001>
module attributes {stable_mosaic.version = 11 : i64} {
  func.func @_matmul_kernel(%arg0: i32, %arg1: i32, %arg2: i32, %arg3: memref<8x32xf32, #tpu.memory_space<vmem>>, %arg4: memref<32x128xbf16, #tpu.memory_space<vmem>>, %arg5: memref<1x128xf32, #tpu.memory_space<vmem>>, %arg6: memref<8x128xf32, #tpu.memory_space<vmem>>, %arg7: memref<8x128xf32, #tpu.memory_space<vmem>>) attributes {dimension_semantics = [#tpu.dimension_semantics<parallel>, #tpu.dimension_semantics<parallel>, #tpu.dimension_semantics<arbitrary>], iteration_bounds = array<i64: 2, 1, 1>, scalar_prefetch = 0 : i64, scratch_operands = 1 : i64, tpu.core_type = #tpu.core_type<tc>, window_params = [{transform_indices = @transform_0, window_bounds = array<i64: 8, 32>}, {transform_indices = @transform_1, window_bounds = array<i64: 32, 128>}, {transform_indices = @transform_2, window_bounds = array<i64: 1, 128>}, {transform_indices = @transform_3, window_bounds = array<i64: 8, 128>}]} {
    %c0_i32 = arith.constant 0 : i32
    %0 = arith.cmpi eq, %arg2, %c0_i32 : i32
    %1 = arith.extui %0 : i1 to i32
    %c0_i32_0 = arith.constant 0 : i32
    %2 = arith.cmpi ne, %1, %c0_i32_0 : i32
    scf.if %2 {
      %cst_10 = arith.constant 0.000000e+00 : f32
      %13 = vector.broadcast %cst_10 : f32 to vector<8x128xf32>
      %c0_11 = arith.constant 0 : index
      %c0_12 = arith.constant 0 : index
      %14 = vector.load %arg7[%c0_11, %c0_12] : memref<8x128xf32, #tpu.memory_space<vmem>>, vector<8x128xf32>
      tpu.vector_store %arg7[%c0_11, %c0_12], %13 {strides = array<i32>} : memref<8x128xf32, #tpu.memory_space<vmem>>, vector<8x128xf32>,
    } else {
    }
    %c0 = arith.constant 0 : index
    %c0_1 = arith.constant 0 : index
    %3 = vector.load %arg3[%c0, %c0_1] : memref<8x32xf32, #tpu.memory_space<vmem>>, vector<8x32xf32>
    %c0_2 = arith.constant 0 : index
    %c0_3 = arith.constant 0 : index
    %4 = vector.load %arg7[%c0_2, %c0_3] : memref<8x128xf32, #tpu.memory_space<vmem>>, vector<8x128xf32>
    %5 = arith.truncf %3 : vector<8x32xf32> to vector<8x32xbf16>
    %c0_4 = arith.constant 0 : index
    %c0_5 = arith.constant 0 : index
    %6 = vector.load %arg4[%c0_4, %c0_5] : memref<32x128xbf16, #tpu.memory_space<vmem>>, vector<32x128xbf16>
    %cst = arith.constant dense<0.000000e+00> : vector<8x128xf32>
    %7 = tpu.matmul %5, %6, %cst {dimension_numbers = #tpu.dot_dimension_numbers<[1], [0], [0], [1], [0, 0, 1, 1], [], []>} : vector<8x32xbf16>, vector<32x128xbf16>, vector<8x128xf32> -> vector<8x128xf32>
    %8 = arith.addf %4, %7 : vector<8x128xf32>
    %c0_6 = arith.constant 0 : index
    %c0_7 = arith.constant 0 : index
    %9 = vector.load %arg7[%c0_6, %c0_7] : memref<8x128xf32, #tpu.memory_space<vmem>>, vector<8x128xf32>
    tpu.vector_store %arg7[%c0_6, %c0_7], %8 {strides = array<i32>} : memref<8x128xf32, #tpu.memory_space<vmem>>, vector<8x128xf32>,
    %c0_i32_8 = arith.constant 0 : i32
    %10 = arith.cmpi eq, %arg2, %c0_i32_8 : i32
    %11 = arith.extui %10 : i1 to i32
    %c0_i32_9 = arith.constant 0 : i32
    %12 = arith.cmpi ne, %11, %c0_i32_9 : i32
    scf.if %12 {
      %c0_10 = arith.constant 0 : index
      %c0_11 = arith.constant 0 : index
      %13 = vector.load %arg7[%c0_10, %c0_11] : memref<8x128xf32, #tpu.memory_space<vmem>>, vector<8x128xf32>
      %c0_12 = arith.constant 0 : index
      %c0_13 = arith.constant 0 : index
      %14 = vector.load %arg5[%c0_12, %c0_13] : memref<1x128xf32, #tpu.memory_space<vmem>>, vector<1x128xf32>
      %15 = vector.broadcast %14 : vector<1x128xf32> to vector<8x128xf32>
      %16 = arith.addf %13, %15 : vector<8x128xf32>
      %c0_14 = arith.constant 0 : index
      %c0_15 = arith.constant 0 : index
      %17 = vector.load %arg6[%c0_14, %c0_15] : memref<8x128xf32, #tpu.memory_space<vmem>>, vector<8x128xf32>
      tpu.vector_store %arg6[%c0_14, %c0_15], %16 {strides = array<i32>} : memref<8x128xf32, #tpu.memory_space<vmem>>, vector<8x128xf32>,
    } else {
    }
    return
  }
  func.func @transform_0(%arg0: i32, %arg1: i32, %arg2: i32) -> (i32, i32) {
    %c0_i32 = arith.constant 0 : i32
    return %arg0, %arg2 : i32, i32
  }
  func.func @transform_1(%arg0: i32, %arg1: i32, %arg2: i32) -> (i32, i32) {
    %c0_i32 = arith.constant 0 : i32
    return %arg2, %arg1 : i32, i32
  }
  func.func @transform_2(%arg0: i32, %arg1: i32, %arg2: i32) -> (i32, i32) {
    %c0_i32 = arith.constant 0 : i32
    %c0_i32_0 = arith.constant 0 : i32
    return %c0_i32, %arg1 : i32, i32
  }
  func.func @transform_3(%arg0: i32, %arg1: i32, %arg2: i32) -> (i32, i32) {
    %c0_i32 = arith.constant 0 : i32
    return %arg0, %arg1 : i32, i32
  }
}

</mosaic_0001>

<llo_original>
// kernel: tpu_custom_call.1
$region0: #{tpu_custom_call.1}
  #allocation0 [shape = 'u32[]', space=smem, size = 0x4, offset = 0x4, fixed_abs, tag = 'smem constant byte address 0x4 - core index']
  #allocation1 [shape = 'u32[144,128]{1,0:T(1,128)}', space=vmem, size = 0x12000, scoped, tag = 'internal scratch']
  #allocation2 [shape = 'f32[8,128]{1,0:T(8,128)}', space=vmem, size = 0x1000, scoped, tag = 'scratch operand']
  %s0 = inlined_call_operand.hbm [shape: f32[16,32], index: 0, kind: input, shape index: {}]
  %s1 = inlined_call_operand.hbm [shape: bf16[32,128], index: 1, kind: input, shape index: {}]
  %s2 = inlined_call_operand.vmem [shape: f32[1,128], index: 2, kind: input, shape index: {}]
  %s3 = inlined_call_operand.hbm [shape: f32[16,128], index: 3, kind: output, shape index: {}]
  %s4 = sld [smem:[#allocation0]]
  $region61: #{tpu_custom_call.1} parent=0
    _
  %s6 = ssub.s32 1, %s4
  %s7 = scalar_select 0, %s6, %s4
  $region1: #{tpu_custom_call.1} parent=0
    #allocation3 [shape = 'u8[8192]{0}', space=vmem, size = 0x2000, scoped, tag = 'input window, operand 0']
    #allocation4 [shape = 's32[2]{0}', space=sflag, size = 0x8, scoped, tag = 'scoped memory for tpu_custom_call.1']
    #allocation5 [shape = 's32[2]{0}', space=sflag, size = 0x8, scoped, tag = 'scoped memory for tpu_custom_call.1']
    #allocation6 [shape = 'u8[8192]{0}', space=vmem, size = 0x2000, scoped, tag = 'input window, operand 1, single buffered']
    #allocation7 [shape = 's32[1]{0}', space=sflag, size = 0x4, scoped, tag = 'scoped memory for tpu_custom_call.1']
    #allocation8 [shape = 'u8[8192]{0}', space=vmem, size = 0x2000, scoped, tag = 'output window, operand 0']
    %8 = vsyncpa [#allocation4], 0
    %s9 = scalar_lea.sflag [#allocation4], 1
    %10 = vsyncpa %s9, 0
    %11 = vsyncpa [#allocation7], 0
    %12 = vsyncpa [#allocation5], 0
    %s13 = scalar_lea.sflag [#allocation5], 1
    %14 = vsyncpa %s13, 0
    loop: start=0, step=1, limit=4
    $region2: #{tpu_custom_call.1} parent=1 // loop_pre_header
      _
    $region3: #{tpu_custom_call.1} parent=1 // loop_header
      %s16 = sphi 0, %s20
      %p17 = scmp.ge.s32.totalorder %s16, 4
      %s23 = sphi 0, %s42
      %s24 = sphi 0, %s38
      %s25 = sphi 0, %s34
      %s26 = sphi 0, %s23
      %s27 = sphi 0, %s24
      %s28 = sphi 0, %s25
      %s29 = sphi 0, %s26
      %s30 = sphi 0, %s27
      %s31 = sphi 0, %s28
      %s47 = sphi 0, %s49
      %s50 = sphi 0, %s47
      %s51 = sphi 0, %s50
      %s67 = sphi 0, %s51
      %s75 = sphi 0, %s77
      %s78 = sphi 0, %s75
      %s79 = sphi 0, %s78
      %s95 = sphi 0, %s79
      %s101 = sphi 0, %s103
      %s104 = sphi 0, %s101
      %s105 = sphi 0, %s104
      %s121 = sphi 0, %s105
      %s129 = sphi 0, %s131
      %s132 = sphi 0, %s129
      %s133 = sphi 0, %s132
      %s149 = sphi 0, %s133
    $region4: #{tpu_custom_call.1} parent=1 // loop_header_branch
      %19 = sbr.rel (%p17) target = $region8
    $region5: #{tpu_custom_call.1} parent=1 // loop_body
      %s21 = ssub.s32 %s16, 1
      %s22 = ssub.s32 %s16, 2
      %s32 = sadd.s32 1, %s25
      %p33 = scmp.ge.s32.totalorder %s32, 1
      %s34 = scalar_select %p33, 0, %s32
      %s35 = sadd.s32 1, %s24
      %s36 = scalar_select %p33, %s35, %s24
      %p37 = scmp.ge.s32.totalorder %s36, 1
      %s38 = scalar_select %p37, 0, %s36
      %s39 = sadd.s32 1, %s23
      %s40 = scalar_select %p37, %s39, %s23
      %p41 = scmp.ge.s32.totalorder %s40, 2
      %s42 = scalar_select %p41, 0, %s40
      %s43 = ssub.s32 %s23, %s42
      %s44 = ssub.s32 %s25, %s34
      %s45 = sor.u32 %s43, %s44
      %p46 = scmp.eq.s32.totalorder %s45, 0
      %s48 = sadd.s32 %s47, 1
      %s49 = scalar_select %p46, %s47, %s48
      %p52 = pneg %p46
      %p53 = scmp.eq.s32.totalorder %s16, 1
      %p54 = por %p52, %p53
      %p55 = scmp.ne.s32.totalorder %s47, %s50
      %p56 = scmp.eq.s32.totalorder %s16, 0
      %p57 = por %p55, %p56
      %p58 = scmp.ne.s32.totalorder %s47, %s50
      %p59 = scmp.eq.s32.totalorder %s21, 1
      %p60 = por %p58, %p59
      %p61 = scmp.ne.s32.totalorder %s50, %s51
      %p62 = scmp.eq.s32.totalorder %s21, 0
      %p63 = por %p61, %p62
      %p64 = scmp.ne.s32.totalorder %s50, %s51
      %p65 = scmp.eq.s32.totalorder %s22, 1
      %p66 = por %p64, %p65
      %p68 = scmp.ne.s32.totalorder %s51, %s67
      %p69 = scmp.eq.s32.totalorder %s22, 0
      %p70 = por %p68, %p69
      %s71 = ssub.s32 %s25, %s34
      %s72 = ssub.s32 %s24, %s38
      %s73 = sor.u32 %s71, %s72
      %p74 = scmp.eq.s32.totalorder %s73, 0
      %s76 = sadd.s32 %s75, 1
      %s77 = scalar_select %p74, %s75, %s76
      %p80 = pneg %p74
      %p81 = scmp.eq.s32.totalorder %s16, 1
      %p82 = por %p80, %p81
      %p83 = scmp.ne.s32.totalorder %s75, %s78
      %p84 = scmp.eq.s32.totalorder %s16, 0
      %p85 = por %p83, %p84
      %p86 = scmp.ne.s32.totalorder %s75, %s78
      %p87 = scmp.eq.s32.totalorder %s21, 1
      %p88 = por %p86, %p87
      %p89 = scmp.ne.s32.totalorder %s78, %s79
      %p90 = scmp.eq.s32.totalorder %s21, 0
      %p91 = por %p89, %p90
      %p92 = scmp.ne.s32.totalorder %s78, %s79
      %p93 = scmp.eq.s32.totalorder %s22, 1
      %p94 = por %p92, %p93
      %p96 = scmp.ne.s32.totalorder %s79, %s95
      %p97 = scmp.eq.s32.totalorder %s22, 0
      %p98 = por %p96, %p97
      %s99 = ssub.s32 %s24, %s38
      %p100 = scmp.eq.s32.totalorder %s99, 0
      %s102 = sadd.s32 %s101, 1
      %s103 = scalar_select %p100, %s101, %s102
      %p106 = pneg %p100
      %p107 = scmp.eq.s32.totalorder %s16, 1
      %p108 = por %p106, %p107
      %p109 = scmp.ne.s32.totalorder %s101, %s104
      %p110 = scmp.eq.s32.totalorder %s16, 0
      %p111 = por %p109, %p110
      %p112 = scmp.ne.s32.totalorder %s101, %s104
      %p113 = scmp.eq.s32.totalorder %s21, 1
      %p114 = por %p112, %p113
      %p115 = scmp.ne.s32.totalorder %s104, %s105
      %p116 = scmp.eq.s32.totalorder %s21, 0
      %p117 = por %p115, %p116
      %p118 = scmp.ne.s32.totalorder %s104, %s105
      %p119 = scmp.eq.s32.totalorder %s22, 1
      %p120 = por %p118, %p119
      %p122 = scmp.ne.s32.totalorder %s105, %s121
      %p123 = scmp.eq.s32.totalorder %s22, 0
      %p124 = por %p122, %p123
      %s125 = ssub.s32 %s23, %s42
      %s126 = ssub.s32 %s24, %s38
      %s127 = sor.u32 %s125, %s126
      %p128 = scmp.eq.s32.totalorder %s127, 0
      %s130 = sadd.s32 %s129, 1
      %s131 = scalar_select %p128, %s129, %s130
      %p134 = pneg %p128
      %p135 = scmp.eq.s32.totalorder %s16, 1
      %p136 = por %p134, %p135
      %p137 = scmp.ne.s32.totalorder %s129, %s132
      %p138 = scmp.eq.s32.totalorder %s16, 0
      %p139 = por %p137, %p138
      %p140 = scmp.ne.s32.totalorder %s129, %s132
      %p141 = scmp.eq.s32.totalorder %s21, 1
      %p142 = por %p140, %p141
      %p143 = scmp.ne.s32.totalorder %s132, %s133
      %p144 = scmp.eq.s32.totalorder %s21, 0
      %p145 = por %p143, %p144
      %p146 = scmp.ne.s32.totalorder %s132, %s133
      %p147 = scmp.eq.s32.totalorder %s22, 1
      %p148 = por %p146, %p147
      %p150 = scmp.ne.s32.totalorder %s133, %s149
      %p151 = scmp.eq.s32.totalorder %s22, 0
      %p152 = por %p150, %p151
      %p153 = scmp.le.s32.totalorder 1, %s16
      %p154 = scmp.lt.s32.totalorder %s16, 3
      %p155 = pnand %p153, %p154
      %p156 = pneg %p155
      // Predicated region
      $region9: #{tpu_custom_call.1} parent=5 // pred_check
        _
      $region10: #{tpu_custom_call.1} parent=5 // pred_check_branch
        %158 = sbr.rel (%p155) target = $region12
      $region11: #{tpu_custom_call.1} parent=5 // pred_region
        %s159 = ssub.s32 %s16, 1
        // Predicated region
        $region13: #{tpu_custom_call.1} parent=11 // pred_check
          %p160 = pneg %p91
        $region14: #{tpu_custom_call.1} parent=11 // pred_check_branch
          %162 = sbr.rel (%p160) target = $region16
        $region15: #{tpu_custom_call.1} parent=11 // pred_region
          %s163 = smul.u32 4, %s28
          %s165 = ssub.s32 256, 256
          %166 = vsyncadd [#allocation7], %s165
          %s167 = sadd.s32 %s27, %s163
          %s168 = smul.addr %s167, 64
          %s169 = scalar_lea.hbm %s1, %s168
          %s170 = sshll.u32 [#allocation6], 4
          %s171 = int_to_ptr.vmem [resolvable:$true] %s170
          %176 = dma.hbm_to_vmem [thread:$0]  %s169, 256, %s171, [#allocation7], 64, 64, 4
        $region16: #{tpu_custom_call.1} parent=11 // pred_fallthru
          _
        // Predicated region
        $region17: #{tpu_custom_call.1} parent=11 // pred_check
          %p177 = pneg %p117
        $region18: #{tpu_custom_call.1} parent=11 // pred_check_branch
          %179 = sbr.rel (%p177) target = $region20
        $region19: #{tpu_custom_call.1} parent=11 // pred_region
          %p180 = scmp.lt.s32.totalorder %s27, 0
          %s181 = scalar_select %p180, %s27, 0
          %s182 = scalar_lea.vmem %s2, %s181
        $region20: #{tpu_custom_call.1} parent=11 // pred_fallthru
          _
      $region12: #{tpu_custom_call.1} parent=5 // pred_fallthru
        _
      %p183 = scmp.lt.s32.totalorder %s16, 2
      // Predicated region
      $region21: #{tpu_custom_call.1} parent=5 // pred_check
        %p184 = pneg %p183
      $region22: #{tpu_custom_call.1} parent=5 // pred_check_branch
        %186 = sbr.rel (%p184) target = $region24
      $region23: #{tpu_custom_call.1} parent=5 // pred_region
        // Predicated region
        $region25: #{tpu_custom_call.1} parent=23 // pred_check
          %p187 = pneg %p57
        $region26: #{tpu_custom_call.1} parent=23 // pred_check_branch
          %189 = sbr.rel (%p187) target = $region28
        $region27: #{tpu_custom_call.1} parent=23 // pred_region
          %s190 = sand.u32 %s47, 1
          %s191 = scalar_lea.sflag [#allocation4], %s190
          %s192 = sand.u32 %s47, 1
          %s193 = smul.addr %s192, 8
          %s194 = scalar_lea.vmem [#allocation3], %s193
          %s196 = ssub.s32 128, 128
          %197 = vsyncadd %s191, %s196
          %s198 = sadd.s32 %s25, %s23
          %s199 = smul.addr %s198, 128
          %s200 = scalar_lea.hbm %s0, %s199
          %s202 = sshll.u32 %s194, 4
          %s203 = int_to_ptr.vmem [resolvable:$true] %s202
          %205 = dma.hbm_to_vmem [thread:$0]  %s200, 128, %s203, %s191
        $region28: #{tpu_custom_call.1} parent=23 // pred_fallthru
          _
      $region24: #{tpu_custom_call.1} parent=5 // pred_fallthru
        _
      %p206 = scmp.le.s32.totalorder 1, %s16
      %p207 = scmp.lt.s32.totalorder %s16, 3
      %p208 = pnand %p206, %p207
      %p209 = pneg %p208
      // Predicated region
      $region29: #{tpu_custom_call.1} parent=5 // pred_check
        _
      $region30: #{tpu_custom_call.1} parent=5 // pred_check_branch
        %211 = sbr.rel (%p208) target = $region32
      $region31: #{tpu_custom_call.1} parent=5 // pred_region
        %s212 = ssub.s32 %s16, 1
        %s213 = sand.u32 %s50, 1
        %s214 = scalar_lea.sflag [#allocation4], %s213
        %s215 = sand.u32 %s50, 1
        %s216 = smul.addr %s215, 8
        %s217 = scalar_lea.vmem [#allocation3], %s216
        // Predicated region
        $region33: #{tpu_custom_call.1} parent=31 // pred_check
          %p218 = pneg %p63
        $region34: #{tpu_custom_call.1} parent=31 // pred_check_branch
          %220 = sbr.rel (%p218) target = $region36
        $region35: #{tpu_custom_call.1} parent=31 // pred_region
          %221 = dma.done %s214, 128
        $region36: #{tpu_custom_call.1} parent=31 // pred_fallthru
          _
        // Predicated region
        $region37: #{tpu_custom_call.1} parent=31 // pred_check
          %p222 = pneg %p91
        $region38: #{tpu_custom_call.1} parent=31 // pred_check_branch
          %224 = sbr.rel (%p222) target = $region40
        $region39: #{tpu_custom_call.1} parent=31 // pred_region
          %225 = dma.done [#allocation7], 256
        $region40: #{tpu_custom_call.1} parent=31 // pred_fallthru
          _
        %s226 = sand.u32 %s50, 1
        %s227 = scalar_lea.sflag [#allocation4], %s226
        %s228 = sand.u32 %s50, 1
        %s229 = smul.addr %s228, 8
        %s230 = scalar_lea.vmem [#allocation3], %s229
        %p231 = pneg %p63
        %p232 = pneg %p60
        %p233 = pneg %p91
        %p234 = pneg %p88
        %p235 = scmp.lt.s32.totalorder %s27, 0
        %s236 = scalar_select %p235, %s27, 0
        %s237 = scalar_lea.vmem %s2, %s236
        %p238 = pneg %p117
        %p239 = pneg %p114
        %p240 = pneg %p145
        %p241 = pneg %p142
        %s242 = sand.u32 %s132, 1
        %s243 = scalar_lea.sflag [#allocation5], %s242
        %s244 = sand.u32 %s132, 1
        %s245 = smul.addr %s244, 8
        %s246 = scalar_lea.vmem [#allocation8], %s245
        %s247 = smul.u32 4, %s28
        %p248 = scmp.lt.s32.totalorder %s27, 0
        %s249 = scalar_select %p248, %s27, 0
        %s250 = scalar_lea.vmem %s2, %s249
        %p252 = scmp.eq.s32.totalorder %s28, 0
        // Predicated region
        $region41: #{tpu_custom_call.1} parent=31 // pred_check
          %p253 = pneg %p252
        $region42: #{tpu_custom_call.1} parent=31 // pred_check_branch
          %255 = sbr.rel (%p253) target = $region44
        $region43: #{tpu_custom_call.1} parent=31 // pred_region
          %256 = vst [vmem:[#allocation2] sm:$0xff] 0.0
        $region44: #{tpu_custom_call.1} parent=31 // pred_fallthru
          _
        %v257 = vld [vmem:[%s217] sm:$0xff]
        %v258 = vld [vmem:[#allocation2] sm:$0xff]
        %v259 = vpack.c.bf16 %v257, %v257
        %v260 = vld [vmem:[#allocation6] sm:$0xf]
        %v261 = vld [vmem:[#allocation6 + $0x4] sm:$0xf]
        %v262 = vld [vmem:[#allocation6 + $0x8] sm:$0xf]
        %v263 = vld [vmem:[#allocation6 + $0xc] sm:$0xf]
        %v268 = vunpack.c.l.b16 %v260
        %v269 = vunpack.c.l.b16 %v261
        %v270 = vunpack.c.l.b16 %v262
        %v271 = vunpack.c.l.b16 %v263
        %v272 = vpack.c.b16 %v269, %v268
        %v273 = vpack.c.b16 %v271, %v270
        %vm276 = vcmask 261120
        %v278 = vsel %vm276, %v259, 0
        %280 = vmatprep.subr.bf16.mxu0 0
        %281 = vmatpush1.bf16.msra.mxu0 %v272
        %282 = vmatprep.subr.bf16.mxu0 0
        %283 = vmatpush1.bf16.msra.mxu0 %v273
        %284 = vmatprep.subr.bf16.mxu0 0
        %285 = vmatpush1.bf16.msra.mxu0 0
        %286 = vmatprep.subr.bf16.mxu0 0
        %287 = vmatpush1.bf16.msra.mxu0 0
        %288 = vmatprep.subr.bf16.mxu0 0
        %289 = vmatpush1.bf16.msra.mxu0 0
        %290 = vmatprep.subr.bf16.mxu0 0
        %291 = vmatpush1.bf16.msra.mxu0 0
        %292 = vmatprep.subr.bf16.mxu0 0
        %293 = vmatpush1.bf16.msra.mxu0 0
        %294 = vmatprep.subr.bf16.mxu0 0
        %295 = vmatpush1.bf16.msra.mxu0 0
        %296 = vmatprep.subr.bf16.mxu0 0
        %297 = vmatpush1.bf16.msra.mxu0 0
        %298 = vmatprep.subr.bf16.mxu0 0
        %299 = vmatpush1.bf16.msra.mxu0 0
        %300 = vmatprep.subr.bf16.mxu0 0
        %301 = vmatpush1.bf16.msra.mxu0 0
        %302 = vmatprep.subr.bf16.mxu0 0
        %303 = vmatpush1.bf16.msra.mxu0 0
        %304 = vmatprep.subr.bf16.mxu0 0
        %305 = vmatpush1.bf16.msra.mxu0 0
        %306 = vmatprep.subr.bf16.mxu0 0
        %307 = vmatpush1.bf16.msra.mxu0 0
        %308 = vmatprep.subr.bf16.mxu0 0
        %309 = vmatpush1.bf16.msra.mxu0 0
        %310 = vmatprep.subr.bf16.mxu0 0
        %311 = vmatpush1.bf16.msra.mxu0 0
        %312 = vmatprep.mubr.bf16.mxu0 0
        %313 = vmatmul.mubr.bf16.gmra.mrb[0].mxu0 %v278
        %v314 = vpop.f32.mrb[0].mxu0
        %v315 = vadd.f32 0.0, %v314
        %v316 = vpop.f32.mrb[0].mxu0
        %v317 = vpop.f32.mrb[0].mxu0
        %v318 = vpop.f32.mrb[0].mxu0
        %319 = vdwg.mxu0
        %v320 = vadd.f32 %v258, %v315
        %321 = vst [vmem:[#allocation2] sm:$0xff] %v320
        // Predicated region
        $region45: #{tpu_custom_call.1} parent=31 // pred_check
          %p322 = pneg %p252
        $region46: #{tpu_custom_call.1} parent=31 // pred_check_branch
          %324 = sbr.rel (%p322) target = $region48
        $region47: #{tpu_custom_call.1} parent=31 // pred_region
          %v325 = vld [vmem:[#allocation2] sm:$0xff]
          %v326 = vld [vmem:[%s250] sm:$0x1]
          %v328 = vlaneseq
          %v329 = vshrl.u32 %v328, 7
          %v330 = vsub.s32 0, %v329
          %v331 = vrot.slane %v326, %v330
          %v333 = vadd.f32 %v325, %v331
          %334 = vst [vmem:[%s246] sm:$0xff] %v333
        $region48: #{tpu_custom_call.1} parent=31 // pred_fallthru
          _
        %s335 = sand.u32 %s132, 1
        %s336 = scalar_lea.sflag [#allocation5], %s335
        %s337 = sand.u32 %s132, 1
        %s338 = smul.addr %s337, 8
        %s339 = scalar_lea.vmem [#allocation8], %s338
        // Predicated region
        $region49: #{tpu_custom_call.1} parent=31 // pred_check
          %p340 = pneg %p142
        $region50: #{tpu_custom_call.1} parent=31 // pred_check_branch
          %342 = sbr.rel (%p340) target = $region52
        $region51: #{tpu_custom_call.1} parent=31 // pred_region
          %s344 = ssub.s32 128, 128
          %345 = vsyncadd %s336, %s344
          %s346 = sadd.s32 %s27, %s26
          %s347 = smul.addr %s346, 128
          %s348 = scalar_lea.hbm %s3, %s347
          %s350 = sshll.u32 %s339, 4
          %s351 = int_to_ptr.vmem [resolvable:$true] %s350
          %353 = dma.vmem_to_hbm [thread:$0]  %s351, 128, %s348, %s336
        $region52: #{tpu_custom_call.1} parent=31 // pred_fallthru
          _
      $region32: #{tpu_custom_call.1} parent=5 // pred_fallthru
        _
      %p354 = scmp.le.s32.totalorder 2, %s16
      // Predicated region
      $region53: #{tpu_custom_call.1} parent=5 // pred_check
        %p355 = pneg %p354
      $region54: #{tpu_custom_call.1} parent=5 // pred_check_branch
        %357 = sbr.rel (%p355) target = $region56
      $region55: #{tpu_custom_call.1} parent=5 // pred_region
        %s358 = ssub.s32 %s16, 2
        // Predicated region
        $region57: #{tpu_custom_call.1} parent=55 // pred_check
          %p359 = pneg %p148
        $region58: #{tpu_custom_call.1} parent=55 // pred_check_branch
          %361 = sbr.rel (%p359) target = $region60
        $region59: #{tpu_custom_call.1} parent=55 // pred_region
          %s362 = sand.u32 %s133, 1
          %s363 = scalar_lea.sflag [#allocation5], %s362
          %s364 = sand.u32 %s133, 1
          %s365 = smul.addr %s364, 8
          %s366 = scalar_lea.vmem [#allocation8], %s365
          %367 = dma.done %s363, 128
        $region60: #{tpu_custom_call.1} parent=55 // pred_fallthru
          _
      $region56: #{tpu_custom_call.1} parent=5 // pred_fallthru
        _
    $region6: #{tpu_custom_call.1} parent=1 // loop_footer
      %s20 = sadd.s32 1, %s16
    $region7: #{tpu_custom_call.1} parent=1 // loop_footer_branch
      %15 = sbr.rel target = $region3
    $region8: #{tpu_custom_call.1} parent=1 // loop_exit
      _
    %368 = vsyncpa [#allocation4], 1
    %s369 = scalar_lea.sflag [#allocation4], 1
    %370 = vsyncpa %s369, 1
    %371 = vsyncpa [#allocation7], 1
    %372 = vsyncpa [#allocation5], 1
    %s373 = scalar_lea.sflag [#allocation5], 1
    %374 = vsyncpa %s373, 1

</llo_original>
